<compile_context>
chip_gen: v5e
topology: v5e:2x2
jax: 0.10.0
libtpu: 0.0.40
codegen_flags: <defaults>
</compile_context>

<pallas_src>
import functools
import math

import jax
import jax.numpy as jnp
from jax.experimental import pallas as pl
from jax.experimental.pallas import tpu as pltpu

EPS = 1e-5                        # PyTorch LayerNorm default eps
_VMEM_LIMIT = 48 * 1024 * 1024    # explicit scoped-VMEM budget (safe on v5e/v6e/v7x)


# ---------------------------------------------------------------------------
# helpers
# ---------------------------------------------------------------------------
def _layernorm(x, g, b):
    """LayerNorm over the last axis (biased variance, like torch). f32 in/out."""
    mu = jnp.mean(x, axis=-1, keepdims=True)
    var = jnp.mean((x - mu) ** 2, axis=-1, keepdims=True)
    return (x - mu) * jax.lax.rsqrt(var + EPS) * g + b


def _adjust_heads(dim, heads):
    """Mirror FlexibleResampler.__init__ head-compatibility adjustment."""
    if dim % heads == 0:
        return heads
    valid = [h for h in (8, 16, 32, 64, 128) if dim % h == 0]
    if not valid:
        raise ValueError(f"No valid head count for dim={dim}")
    return min(valid, key=lambda h: abs(h - heads))


# ---------------------------------------------------------------------------
# proj_in: Linear(embedding_dim -> dim) with bias, grid over (batch, token tiles)
# ---------------------------------------------------------------------------
def _linear_bias_kernel(x_ref, w_ref, b_ref, o_ref):
    # operands in storage dtype (bf16 on the fast MXU path), f32 accumulation
    y = jnp.dot(x_ref[...], w_ref[...], preferred_element_type=jnp.float32)
    o_ref[...] = (y + b_ref[...].astype(jnp.float32)).astype(o_ref.dtype)


def linear_bias(x, w, b, *, token_block=512):
    B, N, Din = x.shape
    Dout = w.shape[1]
    bn = N if N <= token_block else token_block          # full N or 8-row multiple
    grid = (B, pl.cdiv(N, bn))
    return pl.pallas_call(
        _linear_bias_kernel,
        out_shape=jax.ShapeDtypeStruct((B, N, Dout), x.dtype),
        grid=grid,
        in_specs=[
            pl.BlockSpec((None, bn, Din), lambda i, t: (i, t, 0)),
            pl.BlockSpec((Din, Dout), lambda i, t: (0, 0),
                         pipeline_mode=pl.Buffered(1)),   # grid-invariant weight
            pl.BlockSpec((1, Dout), lambda i, t: (0, 0),
                         pipeline_mode=pl.Buffered(1)),
        ],
        out_specs=pl.BlockSpec((None, bn, Dout), lambda i, t: (i, t, 0)),
        compiler_params=pltpu.CompilerParams(
            dimension_semantics=("parallel", "parallel"),
            vmem_limit_bytes=_VMEM_LIMIT),
    )(x, w, b.reshape(1, Dout))


# ---------------------------------------------------------------------------
# fused (PerceiverAttention + residual + FeedForward + residual) x depth layers
# grid = (batch, layer); latents stay resident in a VMEM f32 scratch.
# ---------------------------------------------------------------------------
def _layer_kernel(x_ref, lat0_ref, norm_ref, wq_ref, wk_ref, wv_ref,
                  wout_ref, w1_ref, w2_ref, o_ref, lat_sc, *, heads, dim_head):
    layer = pl.program_id(1)

    @pl.when(layer == 0)
    def _():
        lat_sc[...] = lat0_ref[...].astype(jnp.float32)

    cdt = x_ref.dtype                            # MXU operand dtype (bf16 in prod)
    lat = lat_sc[...]                            # (L, D) f32 residual stream
    norms = norm_ref[...].astype(jnp.float32)    # (6, D): n1 g/b, n2 g/b, ff g/b
    inner = heads * dim_head
    L = lat.shape[0]

    # ---- PerceiverAttention(x, latents) + residual --------------------------
    xn = _layernorm(x_ref[...].astype(jnp.float32),
                    norms[0:1, :], norms[1:2, :]).astype(cdt)         # (N1, D)
    ln = _layernorm(lat, norms[2:3, :], norms[3:4, :]).astype(cdt)    # (L,  D)

    def heads_first(t):      # (S, inner) f32 -> (heads, S, dim_head) compute dtype
        s = t.shape[0]
        return jnp.transpose(t.reshape(s, heads, dim_head), (1, 0, 2)).astype(cdt)

    # fold the full 1/sqrt(dim_head) softmax scale into q while still in f32
    q = heads_first(jnp.dot(ln, wq_ref[...], preferred_element_type=jnp.float32)
                    * (1.0 / math.sqrt(dim_head)))                    # (H, L,  Dh)
    kx = heads_first(jnp.dot(xn, wk_ref[...], preferred_element_type=jnp.float32))
    kl = heads_first(jnp.dot(ln, wk_ref[...], preferred_element_type=jnp.float32))
    vx = heads_first(jnp.dot(xn, wv_ref[...], preferred_element_type=jnp.float32))
    vl = heads_first(jnp.dot(ln, wv_ref[...], preferred_element_type=jnp.float32))

    # batched logits over all heads; the kv "concat" only exists in the softmax
    logits_x = jnp.einsum("hld,hsd->hls", q, kx,
                          preferred_element_type=jnp.float32)         # (H, L, N1)
    logits_l = jnp.einsum("hld,hsd->hls", q, kl,
                          preferred_element_type=jnp.float32)         # (H, L, L)

    m = jnp.maximum(jnp.max(logits_x, axis=-1, keepdims=True),
                    jnp.max(logits_l, axis=-1, keepdims=True))        # (H, L, 1)
    p_x = jnp.exp(logits_x - m)
    p_l = jnp.exp(logits_l - m)
    inv = pl.reciprocal(jnp.sum(p_x, axis=-1, keepdims=True)
                        + jnp.sum(p_l, axis=-1, keepdims=True), approx=True)
    attn = (jnp.einsum("hls,hsd->hld", p_x.astype(cdt), vx,
                       preferred_element_type=jnp.float32)
            + jnp.einsum("hls,hsd->hld", p_l.astype(cdt), vl,
                         preferred_element_type=jnp.float32)) * inv   # (H, L, Dh) f32
    attn = jnp.transpose(attn, (1, 0, 2)).reshape(L, inner).astype(cdt)
    lat = lat + jnp.dot(attn, wout_ref[...], preferred_element_type=jnp.float32)

    # ---- FeedForward + residual ---------------------------------------------
    h = _layernorm(lat, norms[4:5, :], norms[5:6, :]).astype(cdt)
    h = jnp.dot(h, w1_ref[...], preferred_element_type=jnp.float32)
    h = jax.nn.gelu(h, approximate=False).astype(cdt)   # exact erf GELU (torch default)
    lat = lat + jnp.dot(h, w2_ref[...], preferred_element_type=jnp.float32)

    lat_sc[...] = lat

    @pl.when(layer == pl.num_programs(1) - 1)
    def _():
        o_ref[...] = lat.astype(o_ref.dtype)


def resampler_layers(x, queries, params, *, heads, dim_head):
    B, N1, D = x.shape
    L = queries.shape[1]
    depth = params["wq"].shape[0]
    inner = heads * dim_head
    Dff = params["w1"].shape[-1]

    def stacked(*tail):   # per-layer weight stacked along a leading depth axis
        return pl.BlockSpec((None,) + tail, lambda b, l: (l,) + (0,) * len(tail))

    kernel = functools.partial(_layer_kernel, heads=heads, dim_head=dim_head)
    return pl.pallas_call(
        kernel,
        out_shape=jax.ShapeDtypeStruct((B, L, D), x.dtype),
        grid=(B, depth),
        in_specs=[
            pl.BlockSpec((None, N1, D), lambda b, l: (b, 0, 0)),      # x (per batch)
            pl.BlockSpec((None, L, D), lambda b, l: (0, 0, 0),
                         pipeline_mode=pl.Buffered(1)),               # queries (invariant)
            stacked(6, D),          # norms: [n1 g/b, n2 g/b, ff g/b]
            stacked(D, inner),      # wq
            stacked(D, inner),      # wk
            stacked(D, inner),      # wv
            stacked(inner, D),      # wout
            stacked(D, Dff),        # ff w1
            stacked(Dff, D),        # ff w2
        ],
        out_specs=pl.BlockSpec((None, L, D), lambda b, l: (b, 0, 0)),
        scratch_shapes=[pltpu.VMEM((L, D), jnp.float32)],   # resident latents
        compiler_params=pltpu.CompilerParams(
            dimension_semantics=("parallel", "arbitrary"),
            vmem_limit_bytes=_VMEM_LIMIT),
    )(x, queries, params["norms"], params["wq"], params["wk"], params["wv"],
      params["wout"], params["w1"], params["w2"])


# ---------------------------------------------------------------------------
# proj_out + final LayerNorm
# ---------------------------------------------------------------------------
def _proj_out_norm_kernel(x_ref, w_ref, b_ref, g_ref, beta_ref, o_ref):
    y = jnp.dot(x_ref[...], w_ref[...], preferred_element_type=jnp.float32)
    y = y + b_ref[...].astype(jnp.float32)
    o_ref[...] = _layernorm(y, g_ref[...].astype(jnp.float32),
                            beta_ref[...].astype(jnp.float32)).astype(o_ref.dtype)


def proj_out_norm(x, w, b, g, beta):
    B, L, Din = x.shape
    Dout = w.shape[1]
    vec = lambda a: a.reshape(1, -1)

    def wspec(shape):
        return pl.BlockSpec(shape, lambda i: (0,) * len(shape),
                            pipeline_mode=pl.Buffered(1))

    # NOTE: keep output_dim a multiple of 128 in production configs so the final
    # store is lane-dense (unmasked vst); odd dims fall back to masked stores.
    return pl.pallas_call(
        _proj_out_norm_kernel,
        out_shape=jax.ShapeDtypeStruct((B, L, Dout), x.dtype),
        grid=(B,),
        in_specs=[
            pl.BlockSpec((None, L, Din), lambda i: (i, 0, 0)),
            wspec((Din, Dout)),
            wspec((1, Dout)),
            wspec((1, Dout)),
            wspec((1, Dout)),
        ],
        out_specs=pl.BlockSpec((None, L, Dout), lambda i: (i, 0, 0)),
        compiler_params=pltpu.CompilerParams(
            dimension_semantics=("parallel",),
            vmem_limit_bytes=_VMEM_LIMIT),
    )(x, w, vec(b), vec(g), vec(beta))


# ---------------------------------------------------------------------------
# full forward (glue in plain JAX, compute in the kernels above)
# ---------------------------------------------------------------------------
def flexible_resampler_forward(params, x, *, heads, dim_head):
    queries = params["queries"].astype(x.dtype)   # (1, L, D); kernel reads it per batch
    x = linear_bias(x, params["proj_in_w"], params["proj_in_b"])
    latents = resampler_layers(x, queries, params, heads=heads, dim_head=dim_head)
    return proj_out_norm(latents, params["proj_out_w"], params["proj_out_b"],
                         params["norm_out_g"], params["norm_out_b"])


# ---------------------------------------------------------------------------
# pure-JAX reference (correctness check only)
# ---------------------------------------------------------------------------
def _ln_ref(x, g, b):
    mu = x.mean(-1, keepdims=True)
    var = ((x - mu) ** 2).mean(-1, keepdims=True)
    return (x - mu) / jnp.sqrt(var + EPS) * g + b


def reference_forward(params, x, *, heads, dim_head):
    B = x.shape[0]
    lat = jnp.broadcast_to(params["queries"], (B,) + params["queries"].shape[1:])
    x = x @ params["proj_in_w"] + params["proj_in_b"]
    depth = params["wq"].shape[0]
    inner = heads * dim_head
    scale = 1.0 / math.sqrt(math.sqrt(dim_head))

    def rh(t):
        b, s, _ = t.shape
        return t.reshape(b, s, heads, dim_head).transpose(0, 2, 1, 3)

    for l in range(depth):
        n = params["norms"][l]
        xn = _ln_ref(x, n[0], n[1])
        ln = _ln_ref(lat, n[2], n[3])
        q = ln @ params["wq"][l]
        kv_in = jnp.concatenate([xn, ln], axis=1)
        k = kv_in @ params["wk"][l]
        v = kv_in @ params["wv"][l]
        qh, kh, vh = rh(q), rh(k), rh(v)
        w = jnp.einsum("bhld,bhsd->bhls", qh * scale, kh * scale)
        w = jax.nn.softmax(w.astype(jnp.float32), axis=-1)
        o = jnp.einsum("bhls,bhsd->bhld", w, vh)
        o = o.transpose(0, 2, 1, 3).reshape(B, lat.shape[1], inner)
        lat = o @ params["wout"][l] + lat
        h = _ln_ref(lat, n[4], n[5])
        h = jax.nn.gelu(h @ params["w1"][l], approximate=False)
        lat = h @ params["w2"][l] + lat
    y = lat @ params["proj_out_w"] + params["proj_out_b"]
    return _ln_ref(y, params["norm_out_g"], params["norm_out_b"])


# ---------------------------------------------------------------------------
# deterministic synthetic parameters (per-layer weights stacked along depth).
# A real checkpoint's to_kv weight is split column-wise into wk / wv.
# TODO(synk): load_state_dict_flexible (checkpoint-name remapping) is host-side
# I/O with no kernel equivalent; not implemented here.
# ---------------------------------------------------------------------------
def init_params(key, *, dim, depth, dim_head, heads, num_queries,
                embedding_dim, output_dim, ff_mult):
    heads = _adjust_heads(dim, heads)
    inner = dim_head * heads
    dff = int(dim * ff_mult)
    keys = iter(jax.random.split(key, 8 + 6 * depth))

    def lin(k, fi, fo):
        return jax.random.normal(k, (fi, fo), jnp.float32) / math.sqrt(fi)

    params = {
        "queries": jax.random.normal(next(keys), (1, num_queries, dim),
                                     jnp.float32) / math.sqrt(dim),
        "proj_in_w": lin(next(keys), embedding_dim, dim),
        "proj_in_b": 0.01 * jax.random.normal(next(keys), (dim,), jnp.float32),
        "proj_out_w": lin(next(keys), dim, output_dim),
        "proj_out_b": 0.01 * jax.random.normal(next(keys), (output_dim,), jnp.float32),
        "norm_out_g": 1.0 + 0.1 * jax.random.normal(next(keys), (output_dim,), jnp.float32),
        "norm_out_b": 0.05 * jax.random.normal(next(keys), (output_dim,), jnp.float32),
    }
    gk, bk = jax.random.split(next(keys))
    g = 1.0 + 0.1 * jax.random.normal(gk, (depth, 3, dim), jnp.float32)
    b = 0.05 * jax.random.normal(bk, (depth, 3, dim), jnp.float32)
    # rows: [attn.norm1 g, b, attn.norm2 g, b, ff.norm g, b]
    params["norms"] = jnp.stack(
        [g[:, 0], b[:, 0], g[:, 1], b[:, 1], g[:, 2], b[:, 2]], axis=1)
    params["wq"] = jnp.stack([lin(next(keys), dim, inner) for _ in range(depth)])
    params["wk"] = jnp.stack([lin(next(keys), dim, inner) for _ in range(depth)])
    params["wv"] = jnp.stack([lin(next(keys), dim, inner) for _ in range(depth)])
    params["wout"] = jnp.stack([lin(next(keys), inner, dim) for _ in range(depth)])
    params["w1"] = jnp.stack([lin(next(keys), dim, dff) for _ in range(depth)])
    params["w2"] = jnp.stack([lin(next(keys), dff, dim) for _ in range(depth)])
    return params, heads


if __name__ == "__main__":
    cfg = dict(dim=32, depth=2, dim_head=8, heads=4, num_queries=8,
               embedding_dim=16, output_dim=32, ff_mult=4)
    key = jax.random.PRNGKey(0)
    pkey, xkey = jax.random.split(key)
    params, heads = init_params(pkey, **cfg)

    B, N1 = 2, 8  # batch, number of image-feature tokens
    x = jax.random.normal(xkey, (B, N1, cfg["embedding_dim"]), dtype=jnp.float32)

    ref = reference_forward(params, x, heads=heads, dim_head=cfg["dim_head"])

    # f32 storage-dtype path
    out = flexible_resampler_forward(params, x, heads=heads, dim_head=cfg["dim_head"])
    out = jax.block_until_ready(out)
    assert out.shape == (B, cfg["num_queries"], cfg["output_dim"]), out.shape
    err32 = float(jnp.max(jnp.abs(out - ref)))
    assert math.isfinite(err32) and err32 < 1e-2, err32

    # bf16 storage-dtype path (bf16 MXU operands, f32 stats/accumulation)
    params_bf16 = jax.tree_util.tree_map(lambda a: a.astype(jnp.bfloat16), params)
    out_bf16 = flexible_resampler_forward(params_bf16, x.astype(jnp.bfloat16),
                                          heads=heads, dim_head=cfg["dim_head"])
    out_bf16 = jax.block_until_ready(out_bf16)
    assert out_bf16.dtype == jnp.bfloat16
    err16 = float(jnp.max(jnp.abs(out_bf16.astype(jnp.float32) - ref)))
    assert math.isfinite(err16) and err16 < 0.4, err16

    print("KERNEL_OK")
</pallas_src>

<mosaic_0001>
module attributes {stable_mosaic.version = 11 : i64} {
  func.func @_linear_bias_kernel(%arg0: i32, %arg1: i32, %arg2: memref<1x8x16xf32, #tpu.memory_space<vmem>>, %arg3: memref<16x32xf32, #tpu.memory_space<vmem>>, %arg4: memref<1x32xf32, #tpu.memory_space<vmem>>, %arg5: memref<1x8x32xf32, #tpu.memory_space<vmem>>) attributes {dimension_semantics = [#tpu.dimension_semantics<parallel>, #tpu.dimension_semantics<parallel>], iteration_bounds = array<i64: 2, 1>, scalar_prefetch = 0 : i64, scratch_operands = 0 : i64, tpu.core_type = #tpu.core_type<tc>, window_params = [{transform_indices = @transform_0, window_bounds = array<i64: 1, 8, 16>}, {pipeline_mode = #tpu.pipeline_mode<synchronous>, transform_indices = @transform_1, window_bounds = array<i64: 16, 32>}, {pipeline_mode = #tpu.pipeline_mode<synchronous>, transform_indices = @transform_2, window_bounds = array<i64: 1, 32>}, {transform_indices = @transform_3, window_bounds = array<i64: 1, 8, 32>}]} {
    %c0 = arith.constant 0 : index
    %c0_0 = arith.constant 0 : index
    %c0_1 = arith.constant 0 : index
    %0 = vector.load %arg2[%c0, %c0_0, %c0_1] : memref<1x8x16xf32, #tpu.memory_space<vmem>>, vector<1x8x16xf32>
    %1 = vector.shape_cast %0 : vector<1x8x16xf32> to vector<8x16xf32>
    %c0_2 = arith.constant 0 : index
    %c0_3 = arith.constant 0 : index
    %2 = vector.load %arg3[%c0_2, %c0_3] : memref<16x32xf32, #tpu.memory_space<vmem>>, vector<16x32xf32>
    %cst = arith.constant dense<0.000000e+00> : vector<8x32xf32>
    %3 = tpu.matmul %1, %2, %cst {dimension_numbers = #tpu.dot_dimension_numbers<[1], [0], [0], [1], [0, 0, 1, 1], [], []>} : vector<8x16xf32>, vector<16x32xf32>, vector<8x32xf32> -> vector<8x32xf32>
    %c0_4 = arith.constant 0 : index
    %c0_5 = arith.constant 0 : index
    %4 = vector.load %arg4[%c0_4, %c0_5] : memref<1x32xf32, #tpu.memory_space<vmem>>, vector<1x32xf32>
    %5 = vector.broadcast %4 : vector<1x32xf32> to vector<8x32xf32>
    %6 = arith.addf %3, %5 : vector<8x32xf32>
    %c0_6 = arith.constant 0 : index
    %c0_7 = arith.constant 0 : index
    %c0_8 = arith.constant 0 : index
    %7 = vector.load %arg5[%c0_6, %c0_7, %c0_8] : memref<1x8x32xf32, #tpu.memory_space<vmem>>, vector<1x8x32xf32>
    %8 = vector.shape_cast %7 : vector<1x8x32xf32> to vector<8x32xf32>
    %9 = vector.shape_cast %6 : vector<8x32xf32> to vector<1x8x32xf32>
    tpu.vector_store %arg5[%c0_6, %c0_7, %c0_8], %9 {strides = array<i32>} : memref<1x8x32xf32, #tpu.memory_space<vmem>>, vector<1x8x32xf32>,
    return
  }
  func.func @transform_0(%arg0: i32, %arg1: i32) -> (i32, i32, i32) {
    %c0_i32 = arith.constant 0 : i32
    %c0_i32_0 = arith.constant 0 : i32
    return %arg0, %arg1, %c0_i32 : i32, i32, i32
  }
  func.func @transform_1(%arg0: i32, %arg1: i32) -> (i32, i32) {
    %c0_i32 = arith.constant 0 : i32
    %c0_i32_0 = arith.constant 0 : i32
    %c0_i32_1 = arith.constant 0 : i32
    return %c0_i32, %c0_i32_0 : i32, i32
  }
  func.func @transform_2(%arg0: i32, %arg1: i32) -> (i32, i32) {
    %c0_i32 = arith.constant 0 : i32
    %c0_i32_0 = arith.constant 0 : i32
    %c0_i32_1 = arith.constant 0 : i32
    return %c0_i32, %c0_i32_0 : i32, i32
  }
  func.func @transform_3(%arg0: i32, %arg1: i32) -> (i32, i32, i32) {
    %c0_i32 = arith.constant 0 : i32
    %c0_i32_0 = arith.constant 0 : i32
    return %arg0, %arg1, %c0_i32 : i32, i32, i32
  }
}

</mosaic_0001>

<llo_original>
// kernel: tpu_custom_call.1
$region0: #{tpu_custom_call.1}
  #allocation0 [shape = 'u32[]', space=smem, size = 0x4, offset = 0x4, fixed_abs, tag = 'smem constant byte address 0x4 - core index']
  #allocation1 [shape = 'u32[72,128]{1,0:T(1,128)}', space=vmem, size = 0x9000, scoped, tag = 'internal scratch']
  %s0 = inlined_call_operand.hbm [shape: f32[2,8,16], index: 0, kind: input, shape index: {}]
  %s1 = inlined_call_operand.hbm [shape: f32[16,32], index: 1, kind: input, shape index: {}]
  %s2 = inlined_call_operand.vmem [shape: f32[1,32], index: 2, kind: input, shape index: {}]
  %s3 = inlined_call_operand.hbm [shape: f32[2,8,32], index: 3, kind: output, shape index: {}]
  %s4 = sld [smem:[#allocation0]]
  $region53: #{tpu_custom_call.1} parent=0
    _
  %s6 = ssub.s32 1, %s4
  %s7 = scalar_select 0, %s6, %s4
  $region1: #{tpu_custom_call.1} parent=0
    #allocation2 [shape = 'u8[8192]{0}', space=vmem, size = 0x2000, scoped, tag = 'input window, operand 0']
    #allocation3 [shape = 's32[2]{0}', space=sflag, size = 0x8, scoped, tag = 'scoped memory for tpu_custom_call.1']
    #allocation4 [shape = 's32[2]{0}', space=sflag, size = 0x8, scoped, tag = 'scoped memory for tpu_custom_call.1']
    #allocation5 [shape = 'u8[8192]{0}', space=vmem, size = 0x2000, scoped, tag = 'input window, operand 1, single buffered']
    #allocation6 [shape = 's32[1]{0}', space=sflag, size = 0x4, scoped, tag = 'scoped memory for tpu_custom_call.1']
    #allocation7 [shape = 'u8[8192]{0}', space=vmem, size = 0x2000, scoped, tag = 'output window, operand 0']
    %8 = vsyncpa [#allocation3], 0
    %s9 = scalar_lea.sflag [#allocation3], 1
    %10 = vsyncpa %s9, 0
    %11 = vsyncpa [#allocation6], 0
    %12 = vsyncpa [#allocation4], 0
    %s13 = scalar_lea.sflag [#allocation4], 1
    %14 = vsyncpa %s13, 0
    loop: start=0, step=1, limit=4
    $region2: #{tpu_custom_call.1} parent=1 // loop_pre_header
      _
    $region3: #{tpu_custom_call.1} parent=1 // loop_header
      %s16 = sphi 0, %s20
      %p17 = scmp.ge.s32.totalorder %s16, 4
      %s23 = sphi 0, %s35
      %s24 = sphi 0, %s31
      %s25 = sphi 0, %s23
      %s26 = sphi 0, %s24
      %s27 = sphi 0, %s25
      %s28 = sphi 0, %s26
      %s40 = sphi 0, %s42
      %s43 = sphi 0, %s40
      %s44 = sphi 0, %s43
      %s60 = sphi 0, %s44
      %s64 = sphi 0, %s64
      %s66 = sphi 0, %s64
      %s67 = sphi 0, %s66
      %s81 = sphi 0, %s67
      %s85 = sphi 0, %s85
      %s87 = sphi 0, %s85
      %s88 = sphi 0, %s87
      %s102 = sphi 0, %s88
      %s110 = sphi 0, %s112
      %s113 = sphi 0, %s110
      %s114 = sphi 0, %s113
      %s130 = sphi 0, %s114
    $region4: #{tpu_custom_call.1} parent=1 // loop_header_branch
      %19 = sbr.rel (%p17) target = $region8
    $region5: #{tpu_custom_call.1} parent=1 // loop_body
      %s21 = ssub.s32 %s16, 1
      %s22 = ssub.s32 %s16, 2
      %s29 = sadd.s32 1, %s24
      %p30 = scmp.ge.s32.totalorder %s29, 1
      %s31 = scalar_select %p30, 0, %s29
      %s32 = sadd.s32 1, %s23
      %s33 = scalar_select %p30, %s32, %s23
      %p34 = scmp.ge.s32.totalorder %s33, 2
      %s35 = scalar_select %p34, 0, %s33
      %s36 = ssub.s32 %s23, %s35
      %s37 = ssub.s32 %s24, %s31
      %s38 = sor.u32 %s36, %s37
      %p39 = scmp.eq.s32.totalorder %s38, 0
      %s41 = sadd.s32 %s40, 1
      %s42 = scalar_select %p39, %s40, %s41
      %p45 = pneg %p39
      %p46 = scmp.eq.s32.totalorder %s16, 1
      %p47 = por %p45, %p46
      %p48 = scmp.ne.s32.totalorder %s40, %s43
      %p49 = scmp.eq.s32.totalorder %s16, 0
      %p50 = por %p48, %p49
      %p51 = scmp.ne.s32.totalorder %s40, %s43
      %p52 = scmp.eq.s32.totalorder %s21, 1
      %p53 = por %p51, %p52
      %p54 = scmp.ne.s32.totalorder %s43, %s44
      %p55 = scmp.eq.s32.totalorder %s21, 0
      %p56 = por %p54, %p55
      %p57 = scmp.ne.s32.totalorder %s43, %s44
      %p58 = scmp.eq.s32.totalorder %s22, 1
      %p59 = por %p57, %p58
      %p61 = scmp.ne.s32.totalorder %s44, %s60
      %p62 = scmp.eq.s32.totalorder %s22, 0
      %p63 = por %p61, %p62
      %s65 = sadd.s32 %s64, 1
      %p68 = scmp.eq.s32.totalorder %s16, 1
      %p69 = scmp.ne.s32.totalorder %s64, %s66
      %p70 = scmp.eq.s32.totalorder %s16, 0
      %p71 = por %p69, %p70
      %p72 = scmp.ne.s32.totalorder %s64, %s66
      %p73 = scmp.eq.s32.totalorder %s21, 1
      %p74 = por %p72, %p73
      %p75 = scmp.ne.s32.totalorder %s66, %s67
      %p76 = scmp.eq.s32.totalorder %s21, 0
      %p77 = por %p75, %p76
      %p78 = scmp.ne.s32.totalorder %s66, %s67
      %p79 = scmp.eq.s32.totalorder %s22, 1
      %p80 = por %p78, %p79
      %p82 = scmp.ne.s32.totalorder %s67, %s81
      %p83 = scmp.eq.s32.totalorder %s22, 0
      %p84 = por %p82, %p83
      %s86 = sadd.s32 %s85, 1
      %p89 = scmp.eq.s32.totalorder %s16, 1
      %p90 = scmp.ne.s32.totalorder %s85, %s87
      %p91 = scmp.eq.s32.totalorder %s16, 0
      %p92 = por %p90, %p91
      %p93 = scmp.ne.s32.totalorder %s85, %s87
      %p94 = scmp.eq.s32.totalorder %s21, 1
      %p95 = por %p93, %p94
      %p96 = scmp.ne.s32.totalorder %s87, %s88
      %p97 = scmp.eq.s32.totalorder %s21, 0
      %p98 = por %p96, %p97
      %p99 = scmp.ne.s32.totalorder %s87, %s88
      %p100 = scmp.eq.s32.totalorder %s22, 1
      %p101 = por %p99, %p100
      %p103 = scmp.ne.s32.totalorder %s88, %s102
      %p104 = scmp.eq.s32.totalorder %s22, 0
      %p105 = por %p103, %p104
      %s106 = ssub.s32 %s23, %s35
      %s107 = ssub.s32 %s24, %s31
      %s108 = sor.u32 %s106, %s107
      %p109 = scmp.eq.s32.totalorder %s108, 0
      %s111 = sadd.s32 %s110, 1
      %s112 = scalar_select %p109, %s110, %s111
      %p115 = pneg %p109
      %p116 = scmp.eq.s32.totalorder %s16, 1
      %p117 = por %p115, %p116
      %p118 = scmp.ne.s32.totalorder %s110, %s113
      %p119 = scmp.eq.s32.totalorder %s16, 0
      %p120 = por %p118, %p119
      %p121 = scmp.ne.s32.totalorder %s110, %s113
      %p122 = scmp.eq.s32.totalorder %s21, 1
      %p123 = por %p121, %p122
      %p124 = scmp.ne.s32.totalorder %s113, %s114
      %p125 = scmp.eq.s32.totalorder %s21, 0
      %p126 = por %p124, %p125
      %p127 = scmp.ne.s32.totalorder %s113, %s114
      %p128 = scmp.eq.s32.totalorder %s22, 1
      %p129 = por %p127, %p128
      %p131 = scmp.ne.s32.totalorder %s114, %s130
      %p132 = scmp.eq.s32.totalorder %s22, 0
      %p133 = por %p131, %p132
      %p134 = scmp.le.s32.totalorder 1, %s16
      %p135 = scmp.lt.s32.totalorder %s16, 3
      %p136 = pnand %p134, %p135
      %p137 = pneg %p136
      // Predicated region
      $region9: #{tpu_custom_call.1} parent=5 // pred_check
        _
      $region10: #{tpu_custom_call.1} parent=5 // pred_check_branch
        %139 = sbr.rel (%p136) target = $region12
      $region11: #{tpu_custom_call.1} parent=5 // pred_region
        %s140 = ssub.s32 %s16, 1
        // Predicated region
        $region13: #{tpu_custom_call.1} parent=11 // pred_check
          %p141 = pneg %p77
        $region14: #{tpu_custom_call.1} parent=11 // pred_check_branch
          %143 = sbr.rel (%p141) target = $region16
        $region15: #{tpu_custom_call.1} parent=11 // pred_region
          %145 = vsyncadd [#allocation6], 0
          %s146 = sshll.u32 %s1, 4
          %s147 = int_to_ptr.hbm [resolvable:$true] %s146
          %s148 = sshll.u32 [#allocation5], 4
          %s149 = int_to_ptr.vmem [resolvable:$true] %s148
          %154 = dma.hbm_to_vmem [thread:$0]  %s147, 256, %s149, [#allocation6], 128, 128, 8
        $region16: #{tpu_custom_call.1} parent=11 // pred_fallthru
          _
        // Predicated region
        $region17: #{tpu_custom_call.1} parent=11 // pred_check
          %p155 = pneg %p98
        $region18: #{tpu_custom_call.1} parent=11 // pred_check_branch
          %157 = sbr.rel (%p155) target = $region20
        $region19: #{tpu_custom_call.1} parent=11 // pred_region
          _
        $region20: #{tpu_custom_call.1} parent=11 // pred_fallthru
          _
      $region12: #{tpu_custom_call.1} parent=5 // pred_fallthru
        _
      %p158 = scmp.lt.s32.totalorder %s16, 2
      // Predicated region
      $region21: #{tpu_custom_call.1} parent=5 // pred_check
        %p159 = pneg %p158
      $region22: #{tpu_custom_call.1} parent=5 // pred_check_branch
        %161 = sbr.rel (%p159) target = $region24
      $region23: #{tpu_custom_call.1} parent=5 // pred_region
        // Predicated region
        $region25: #{tpu_custom_call.1} parent=23 // pred_check
          %p162 = pneg %p50
        $region26: #{tpu_custom_call.1} parent=23 // pred_check_branch
          %164 = sbr.rel (%p162) target = $region28
        $region27: #{tpu_custom_call.1} parent=23 // pred_region
          %s165 = sand.u32 %s40, 1
          %s166 = scalar_lea.sflag [#allocation3], %s165
          %s167 = sand.u32 %s40, 1
          %s168 = smul.addr %s167, 8
          %s169 = scalar_lea.vmem [#allocation2], %s168
          %171 = vsyncadd %s166, 0
          %s172 = sadd.s32 %s24, %s23
          %s173 = smul.addr %s172, 8
          %s174 = scalar_lea.hbm %s0, %s173
          %s176 = sshll.u32 %s174, 4
          %s177 = int_to_ptr.hbm [resolvable:$true] %s176
          %s178 = sshll.u32 %s169, 4
          %s179 = int_to_ptr.vmem [resolvable:$true] %s178
          %181 = dma.hbm_to_vmem [thread:$0]  %s177, 128, %s179, %s166
        $region28: #{tpu_custom_call.1} parent=23 // pred_fallthru
          _
      $region24: #{tpu_custom_call.1} parent=5 // pred_fallthru
        _
      %p182 = scmp.le.s32.totalorder 1, %s16
      %p183 = scmp.lt.s32.totalorder %s16, 3
      %p184 = pnand %p182, %p183
      %p185 = pneg %p184
      // Predicated region
      $region29: #{tpu_custom_call.1} parent=5 // pred_check
        _
      $region30: #{tpu_custom_call.1} parent=5 // pred_check_branch
        %187 = sbr.rel (%p184) target = $region32
      $region31: #{tpu_custom_call.1} parent=5 // pred_region
        %s188 = ssub.s32 %s16, 1
        %s189 = sand.u32 %s43, 1
        %s190 = scalar_lea.sflag [#allocation3], %s189
        %s191 = sand.u32 %s43, 1
        %s192 = smul.addr %s191, 8
        %s193 = scalar_lea.vmem [#allocation2], %s192
        // Predicated region
        $region33: #{tpu_custom_call.1} parent=31 // pred_check
          %p194 = pneg %p56
        $region34: #{tpu_custom_call.1} parent=31 // pred_check_branch
          %196 = sbr.rel (%p194) target = $region36
        $region35: #{tpu_custom_call.1} parent=31 // pred_region
          %198 = dma.done %s190, 128
        $region36: #{tpu_custom_call.1} parent=31 // pred_fallthru
          _
        // Predicated region
        $region37: #{tpu_custom_call.1} parent=31 // pred_check
          %p199 = pneg %p77
        $region38: #{tpu_custom_call.1} parent=31 // pred_check_branch
          %201 = sbr.rel (%p199) target = $region40
        $region39: #{tpu_custom_call.1} parent=31 // pred_region
          %203 = dma.done [#allocation6], 256
        $region40: #{tpu_custom_call.1} parent=31 // pred_fallthru
          _
        %s204 = sand.u32 %s43, 1
        %s205 = scalar_lea.sflag [#allocation3], %s204
        %s206 = sand.u32 %s43, 1
        %s207 = smul.addr %s206, 8
        %s208 = scalar_lea.vmem [#allocation2], %s207
        %p209 = pneg %p56
        %p210 = pneg %p53
        %p211 = pneg %p77
        %p212 = pneg %p74
        %p213 = pneg %p98
        %p214 = pneg %p95
        %p215 = pneg %p126
        %p216 = pneg %p123
        %s217 = sand.u32 %s113, 1
        %s218 = scalar_lea.sflag [#allocation4], %s217
        %s219 = sand.u32 %s113, 1
        %s220 = smul.addr %s219, 8
        %s221 = scalar_lea.vmem [#allocation7], %s220
        %v222 = vld [vmem:[%s193] sm:$0xff]
        %v223 = vld [vmem:[#allocation5] sm:$0xff]
        %v224 = vld [vmem:[#allocation5 + $0x8] sm:$0xff]
        %v225 = vld [vmem:[%s2] sm:$0x1]
        %v227 = vperm.slane %v225, 0
        %vm229 = vcmask 130048
        %v231 = vsel %vm229, %v222, 0
        %233 = vmatpush.msra.mxu0 0.0
        %234 = vmatpush.msra.mxu0 0.0
        %235 = vmatpush.msra.mxu0 0.0
        %236 = vmatpush.msra.mxu0 0.0
        %237 = vmatpush.msra.mxu0 0.0
        %238 = vmatpush.msra.mxu0 0.0
        %239 = vmatpush.msra.mxu0 0.0
        %240 = vmatpush.msra.mxu0 0.0
        %241 = vmatpush.msra.mxu0 0.0
        %242 = vmatpush.msra.mxu0 0.0
        %243 = vmatpush.msra.mxu0 0.0
        %244 = vmatpush.msra.mxu0 0.0
        %245 = vmatpush.msra.mxu0 0.0
        %246 = vmatpush.msra.mxu0 0.0
        %247 = vmatpush.msra.mxu0 %v224
        %248 = vmatpush.msra.mxu0 %v223
        %249 = vmatmul.f32.gmra.mxu0 %v231
        %v250 = vpop.f32.mrf.mxu0
        %v251 = vadd.f32 %v227, %v250
        %252 = vdwg.mxu0
        %vm253 = vcmask 261120
        %254 = vst.msk [vmem:[%s221] sm:$0xff] %vm253, %v251
        %s255 = sand.u32 %s113, 1
        %s256 = scalar_lea.sflag [#allocation4], %s255
        %s257 = sand.u32 %s113, 1
        %s258 = smul.addr %s257, 8
        %s259 = scalar_lea.vmem [#allocation7], %s258
        // Predicated region
        $region41: #{tpu_custom_call.1} parent=31 // pred_check
          %p260 = pneg %p123
        $region42: #{tpu_custom_call.1} parent=31 // pred_check_branch
          %262 = sbr.rel (%p260) target = $region44
        $region43: #{tpu_custom_call.1} parent=31 // pred_region
          %264 = vsyncadd %s256, 0
          %s265 = sadd.s32 %s26, %s25
          %s266 = smul.addr %s265, 8
          %s267 = scalar_lea.hbm %s3, %s266
          %s269 = sshll.u32 %s259, 4
          %s270 = int_to_ptr.vmem [resolvable:$true] %s269
          %s271 = sshll.u32 %s267, 4
          %s272 = int_to_ptr.hbm [resolvable:$true] %s271
          %274 = dma.vmem_to_hbm [thread:$0]  %s270, 128, %s272, %s256
        $region44: #{tpu_custom_call.1} parent=31 // pred_fallthru
          _
      $region32: #{tpu_custom_call.1} parent=5 // pred_fallthru
        _
      %p275 = scmp.le.s32.totalorder 2, %s16
      // Predicated region
      $region45: #{tpu_custom_call.1} parent=5 // pred_check
        %p276 = pneg %p275
      $region46: #{tpu_custom_call.1} parent=5 // pred_check_branch
        %278 = sbr.rel (%p276) target = $region48
      $region47: #{tpu_custom_call.1} parent=5 // pred_region
        %s279 = ssub.s32 %s16, 2
        // Predicated region
        $region49: #{tpu_custom_call.1} parent=47 // pred_check
          %p280 = pneg %p129
        $region50: #{tpu_custom_call.1} parent=47 // pred_check_branch
          %282 = sbr.rel (%p280) target = $region52
        $region51: #{tpu_custom_call.1} parent=47 // pred_region
          %s283 = sand.u32 %s114, 1
          %s284 = scalar_lea.sflag [#allocation4], %s283
          %s285 = sand.u32 %s114, 1
          %s286 = smul.addr %s285, 8
          %s287 = scalar_lea.vmem [#allocation7], %s286
          %289 = dma.done %s284, 128
        $region52: #{tpu_custom_call.1} parent=47 // pred_fallthru
          _
      $region48: #{tpu_custom_call.1} parent=5 // pred_fallthru
        _
    $region6: #{tpu_custom_call.1} parent=1 // loop_footer
      %s20 = sadd.s32 1, %s16
    $region7: #{tpu_custom_call.1} parent=1 // loop_footer_branch
      %15 = sbr.rel target = $region3
    $region8: #{tpu_custom_call.1} parent=1 // loop_exit
      _
    %290 = vsyncpa [#allocation3], 1
    %s291 = scalar_lea.sflag [#allocation3], 1
    %292 = vsyncpa %s291, 1
    %293 = vsyncpa [#allocation6], 1
    %294 = vsyncpa [#allocation4], 1
    %s295 = scalar_lea.sflag [#allocation4], 1
    %296 = vsyncpa %s295, 1

</llo_original>
